<compile_context>
chip_gen: v6e
topology: v6e:2x2x1
jax: 0.10.0
libtpu: 0.0.40
codegen_flags: <defaults>
</compile_context>

<pallas_src>
import numpy as np
import jax
import jax.numpy as jnp
from jax.experimental import pallas as pl
from jax.experimental.pallas import tpu as pltpu

EPS = 1e-5


def _round_up(x, m):
    return ((x + m - 1) // m) * m


# ----------------------------- Pallas kernels ------------------------------ #

def proj_kernel(x_ref, wp_ref, out_ref):
    """Per-node projection for the split first EdgeConv Linear.

    Wp = [W1_top - W1_bot | W1_bot], shape (C_in, 2*C_out).
    """
    out_ref[...] = jnp.dot(x_ref[...], wp_ref[...],
                           preferred_element_type=jnp.float32)


def edgeconv_kernel(hpre_ref, dst_ref, invdeg_ref, vec_ref, w2_ref, out_ref):
    """One EdgeConv layer: per-edge MLP + sparsity-aware mean aggregation.

    grid = (node_tiles, edge_tiles).  The output block (tn, C) is resident
    across the (inner, "arbitrary") edge axis and acts as the accumulator.
    hpre already contains ef @ W1 (+ bias folded into BN shift), so the
    per-edge MLP is:  BN -> ReLU -> Linear -> ReLU -> BN  (Dropout = identity).
    vec rows: 0:s1  1:sh1  2:b2  3:s2  4:sh2.

    The (tn, te) scatter matrix is built in-register from dst indices — the
    (N, E) incidence matrix never exists in HBM.  Padded edges carry dst = -1
    and therefore never match a node id.  Note: the per-edge MLP is recomputed
    once per node tile; with the toy sizes there is a single node tile.
    """
    i = pl.program_id(0)
    e = pl.program_id(1)
    tn = out_ref.shape[0]
    te = dst_ref.shape[1]

    s1 = vec_ref[0:1, :]
    sh1 = vec_ref[1:2, :]
    b2 = vec_ref[2:3, :]
    s2 = vec_ref[3:4, :]
    sh2 = vec_ref[4:5, :]

    # per-edge MLP (eval mode):  (Lin->)BN -> ReLU -> Lin -> ReLU -> BN
    h = jnp.maximum(hpre_ref[...] * s1 + sh1, 0.0)
    u = jnp.dot(h, w2_ref[...], preferred_element_type=jnp.float32) + b2
    msg = jnp.maximum(u, 0.0) * s2 + sh2

    # Mean aggregation: one-hot(dst) scaled by 1/deg, built from indices.
    node_ids = i * tn + jax.lax.broadcasted_iota(jnp.int32, (tn, te), 0)
    sel = (node_ids == dst_ref[...]).astype(jnp.float32)      # (tn, te)
    agg = sel * invdeg_ref[...]                                # 1/deg baked in
    part = jnp.dot(agg, msg, preferred_element_type=jnp.float32)

    @pl.when(e == 0)
    def _():
        out_ref[...] = jnp.zeros_like(out_ref)
    out_ref[...] += part


def make_tail_kernel(num_fc):
    """Fused tail: fusion block -> global_mean_pool -> FC stack -> sigmoid."""
    def tail_kernel(*refs):
        x_ref, p_ref = refs[0], refs[1]
        k = 2
        wf, bf, sf, shf = refs[k:k + 4]
        k += 4
        # fusion block: Linear -> ReLU -> BN
        h = jnp.dot(x_ref[...], wf[...],
                    preferred_element_type=jnp.float32) + bf[...]
        h = jnp.maximum(h, 0.0) * sf[...] + shf[...]
        # global_mean_pool as matmul with the tiny (G, N) averaging matrix.
        h = jnp.dot(p_ref[...], h, preferred_element_type=jnp.float32)
        # hidden FCs: Linear -> ReLU -> BN (-> Dropout = identity)
        for _ in range(num_fc):
            w, b, s, sh = refs[k:k + 4]
            k += 4
            h = jnp.dot(h, w[...], preferred_element_type=jnp.float32) + b[...]
            h = jnp.maximum(h, 0.0) * s[...] + sh[...]
        # final: Linear -> BN -> sigmoid (bias folded into BN shift)
        wl, sl, shl = refs[k:k + 3]
        k += 3
        out_ref = refs[k]
        z = jnp.dot(h, wl[...], preferred_element_type=jnp.float32)
        out_ref[...] = jax.nn.sigmoid(z * sl[...] + shl[...])
    return tail_kernel


# ----------------------------- kernel wrappers ------------------------------ #

def node_proj(x, wp):
    # Small dense matmul; full-array blocks in VMEM (no grid).
    n_pad = x.shape[0]
    c2 = wp.shape[1]
    return pl.pallas_call(
        proj_kernel,
        out_shape=jax.ShapeDtypeStruct((n_pad, c2), jnp.float32),
    )(x, wp)


def edgeconv(hpre, dst_row, invdeg, vec, w2, *, tn, te):
    e_pad, c = hpre.shape
    n_pad = invdeg.shape[0]
    grid = (n_pad // tn, e_pad // te)
    flops = grid[0] * (2 * e_pad * c * c) + 2 * n_pad * e_pad * c
    bytes_acc = 4 * (e_pad * c + e_pad + n_pad + 5 * c + c * c + n_pad * c)
    return pl.pallas_call(
        edgeconv_kernel,
        out_shape=jax.ShapeDtypeStruct((n_pad, c), jnp.float32),
        grid_spec=pltpu.PrefetchScalarGridSpec(
            num_scalar_prefetch=0,
            grid=grid,
            in_specs=[
                pl.BlockSpec((te, c), lambda i, e: (e, 0)),   # per-edge pre-act
                pl.BlockSpec((1, te), lambda i, e: (0, e)),   # dst indices (int32)
                pl.BlockSpec((tn, 1), lambda i, e: (i, 0)),   # 1/deg per node tile
                pl.BlockSpec((5, c), lambda i, e: (0, 0)),    # packed s1,sh1,b2,s2,sh2
                pl.BlockSpec((c, c), lambda i, e: (0, 0)),    # W2
            ],
            out_specs=pl.BlockSpec((tn, c), lambda i, e: (i, 0)),
        ),
        compiler_params=pltpu.CompilerParams(
            dimension_semantics=("parallel", "arbitrary")),
        cost_estimate=pl.CostEstimate(flops=int(flops), transcendentals=0,
                                      bytes_accessed=int(bytes_acc)),
    )(hpre, dst_row, invdeg, vec, w2)


def tail(x_cat, pool_mat, fusion, fc_hidden, fc_final):
    num_fc = len(fc_hidden)
    args = [x_cat, pool_mat, *fusion]
    for fc in fc_hidden:
        args.extend(fc)
    args.extend(fc_final)
    num_graphs = pool_mat.shape[0]
    num_classes = fc_final[0].shape[1]
    return pl.pallas_call(
        make_tail_kernel(num_fc),
        out_shape=jax.ShapeDtypeStruct((num_graphs, num_classes), jnp.float32),
    )(*args)


# ----------------------------- parameter setup ------------------------------ #

def init_linear(key, din, dout):
    kw, kb = jax.random.split(key)
    bound = 1.0 / np.sqrt(din)
    w = jax.random.uniform(kw, (din, dout), jnp.float32, -bound, bound)
    b = jax.random.uniform(kb, (dout,), jnp.float32, -bound, bound)
    return w, b


def init_bn(key, d):
    k1, k2, k3, k4 = jax.random.split(key, 4)
    gamma = jax.random.uniform(k1, (d,), jnp.float32, 0.5, 1.5)
    beta = 0.1 * jax.random.normal(k2, (d,), jnp.float32)
    mean = 0.1 * jax.random.normal(k3, (d,), jnp.float32)
    var = jax.random.uniform(k4, (d,), jnp.float32, 0.5, 1.5)
    return gamma, beta, mean, var


def build_edgeconv_params(key, cin, cout):
    k1, k2, k3, k4 = jax.random.split(key, 4)
    w1, b1 = init_linear(k1, 2 * cin, cout)
    g1, be1, m1, v1 = init_bn(k2, cout)
    w2, b2 = init_linear(k3, cout, cout)
    g2, be2, m2, v2 = init_bn(k4, cout)
    s1 = g1 / jnp.sqrt(v1 + EPS)
    sh1 = be1 + (b1 - m1) * s1        # Linear bias folded into BN (BN right after Linear)
    s2 = g2 / jnp.sqrt(v2 + EPS)
    sh2 = be2 - m2 * s2               # BN after ReLU -> bias b2 stays separate
    return (w1, s1.reshape(1, -1), sh1.reshape(1, -1),
            w2, b2.reshape(1, -1), s2.reshape(1, -1), sh2.reshape(1, -1))


def build_dense_bn_params(key, din, dout):
    k1, k2 = jax.random.split(key)
    w, b = init_linear(k1, din, dout)
    g, be, m, v = init_bn(k2, dout)
    s = g / jnp.sqrt(v + EPS)
    sh = be - m * s
    return (w, b.reshape(1, -1), s.reshape(1, -1), sh.reshape(1, -1))


def build_params(key, conv_params, fc_params, input_dims, num_classes):
    keys = list(jax.random.split(key, 64))
    ki = iter(keys)
    params = {}
    params["bn_fts"] = init_bn(next(ki), input_dims)

    edge_convs = []
    in_feat = input_dims
    for channels in conv_params:
        out_feat = channels[1]
        edge_convs.append(build_edgeconv_params(next(ki), in_feat, out_feat))
        in_feat = channels[-1]
    params["edge_convs"] = edge_convs

    in_chn = sum(cp[-1] for cp in conv_params)
    out_chn = int(np.clip(in_chn // 128 * 128, 128, 1024))
    params["fusion"] = build_dense_bn_params(next(ki), in_chn, out_chn)

    fc_hidden = []
    prev = out_chn
    for (ch, _drop) in fc_params:
        fc_hidden.append(build_dense_bn_params(next(ki), prev, ch))
        prev = ch
    params["fc_hidden"] = fc_hidden

    kf1, kf2 = jax.random.split(next(ki))
    w, b = init_linear(kf1, prev, num_classes)
    g, be, m, v = init_bn(kf2, num_classes)
    s = g / jnp.sqrt(v + EPS)
    sh = be + (b - m) * s
    params["fc_final"] = (w, s.reshape(1, -1), sh.reshape(1, -1))
    return params


# ------------------------------ forward passes ------------------------------ #

def lundnet_forward(params, x, edge_index, batch, num_graphs):
    src = edge_index[0].astype(jnp.int32)
    dst = edge_index[1].astype(jnp.int32)
    n_nodes = x.shape[0]
    n_edges = src.shape[0]

    # ---- tiling / padding choices (ragged-safe) ---------------------------- #
    if n_nodes <= 512:
        n_pad = _round_up(n_nodes, 8)
        tn = n_pad
    else:
        tn = 256
        n_pad = _round_up(n_nodes, tn)
    te = min(_round_up(n_edges, 128), 2048)
    e_pad = _round_up(n_edges, te)

    # bn_fts (eval-mode BatchNorm1d): tiny elementwise, kept as JAX glue.
    g, be, m, v = params["bn_fts"]
    s = g / jnp.sqrt(v + EPS)
    x = x * s + (be - m * s)
    x = jnp.pad(x, ((0, n_pad - n_nodes), (0, 0)))

    # Per-node 1/deg for mean aggregation (padded nodes never match any dst).
    deg = jnp.zeros((n_nodes,), jnp.float32).at[dst].add(1.0)
    invdeg = 1.0 / jnp.maximum(deg, 1.0)
    invdeg = jnp.pad(invdeg, (0, n_pad - n_nodes),
                     constant_values=1.0).reshape(n_pad, 1)

    # Padded edges: gather with a valid index (0), mask in-kernel via dst = -1.
    pad_e = e_pad - n_edges
    src_g = jnp.pad(src, (0, pad_e))
    dst_g = jnp.pad(dst, (0, pad_e))
    dst_m = jnp.pad(dst, (0, pad_e), constant_values=-1).reshape(1, e_pad)

    outputs = []
    for (w1, s1, sh1, w2, b2, s2, sh2) in params["edge_convs"]:
        cin = x.shape[1]
        c = w1.shape[1]
        # Split first Linear:  ef @ W1 = xi @ (W1_top - W1_bot) + xj @ W1_bot.
        wp = jnp.concatenate([w1[:cin] - w1[cin:], w1[cin:]], axis=1)
        proj = node_proj(x, wp)                                  # (n_pad, 2C)
        # Per-edge gather + add: (E, C) instead of an (E, 2C) concat; XLA glue.
        hpre = proj[dst_g, :c] + proj[src_g, c:]
        vec = jnp.concatenate([s1, sh1, b2, s2, sh2], axis=0)    # (5, C) packed
        x = edgeconv(hpre, dst_m, invdeg, vec, w2, tn=tn, te=te)
        outputs.append(x[:n_nodes])

    x_cat = jnp.concatenate(outputs, axis=1)

    # Tiny (G, N) per-graph averaging matrix for global_mean_pool.
    counts = jnp.zeros((num_graphs,), jnp.float32).at[batch].add(1.0)
    pool_mat = (jnp.arange(num_graphs)[:, None] == batch[None, :]).astype(jnp.float32)
    pool_mat = pool_mat / jnp.maximum(counts, 1.0)[:, None]

    # Fused tail: fusion -> pool -> hidden FCs -> final Linear+BN -> sigmoid.
    return tail(x_cat, pool_mat, params["fusion"], params["fc_hidden"],
                params["fc_final"])


def reference_forward(params, x, edge_index, batch, num_graphs):
    """Pure-JAX reference (same eval-mode math as the PyTorch forward)."""
    hp = jax.lax.Precision.HIGHEST
    src, dst = edge_index[0], edge_index[1]
    n_nodes = x.shape[0]

    g, be, m, v = params["bn_fts"]
    s = g / jnp.sqrt(v + EPS)
    x = x * s + (be - m * s)

    deg = jnp.maximum(jnp.zeros((n_nodes,), jnp.float32).at[dst].add(1.0), 1.0)

    outputs = []
    for (w1, s1, sh1, w2, b2, s2, sh2) in params["edge_convs"]:
        xi, xj = x[dst], x[src]
        ef = jnp.concatenate([xi, xj - xi], axis=1)
        h = jnp.maximum(jnp.dot(ef, w1, precision=hp) * s1 + sh1, 0.0)
        u = jnp.maximum(jnp.dot(h, w2, precision=hp) + b2, 0.0)
        msg = u * s2 + sh2
        x = jnp.zeros((n_nodes, msg.shape[1]), jnp.float32).at[dst].add(msg) / deg[:, None]
        outputs.append(x)

    x = jnp.concatenate(outputs, axis=1)
    wf, bf, sf, shf = params["fusion"]
    x = jnp.maximum(jnp.dot(x, wf, precision=hp) + bf, 0.0) * sf + shf

    counts = jnp.maximum(jnp.zeros((num_graphs,), jnp.float32).at[batch].add(1.0), 1.0)
    x = jnp.zeros((num_graphs, x.shape[1]), jnp.float32).at[batch].add(x) / counts[:, None]

    for (w, b, sc, sh) in params["fc_hidden"]:
        x = jnp.maximum(jnp.dot(x, w, precision=hp) + b, 0.0) * sc + sh

    wl, sl, shl = params["fc_final"]
    x = jax.nn.sigmoid(jnp.dot(x, wl, precision=hp) * sl + shl)
    return x


# ----------------------------------- main ----------------------------------- #

if __name__ == "__main__":
    conv_params = [(16, 16), (16, 16), (32, 32)]
    fc_params = [(64, 0.1)]
    input_dims = 3
    num_classes = 1

    num_graphs = 2
    nodes_per_graph = 16
    n_nodes = num_graphs * nodes_per_graph
    edges_per_graph = 128
    n_edges = num_graphs * edges_per_graph

    key = jax.random.PRNGKey(0)
    k_x, k_e, k_p = jax.random.split(key, 3)

    x = jax.random.normal(k_x, (n_nodes, input_dims), jnp.float32)

    src_parts, dst_parts = [], []
    ek = jax.random.split(k_e, 2 * num_graphs)
    for gidx in range(num_graphs):
        s_g = jax.random.randint(ek[2 * gidx], (edges_per_graph,), 0, nodes_per_graph)
        d_g = jax.random.randint(ek[2 * gidx + 1], (edges_per_graph,), 0, nodes_per_graph)
        src_parts.append(s_g + gidx * nodes_per_graph)
        dst_parts.append(d_g + gidx * nodes_per_graph)
    edge_index = jnp.stack([jnp.concatenate(src_parts), jnp.concatenate(dst_parts)])
    batch = jnp.repeat(jnp.arange(num_graphs, dtype=jnp.int32), nodes_per_graph)

    params = build_params(k_p, conv_params, fc_params, input_dims, num_classes)

    out = jax.block_until_ready(
        lundnet_forward(params, x, edge_index, batch, num_graphs))
    ref = jax.block_until_ready(
        reference_forward(params, x, edge_index, batch, num_graphs))

    assert out.shape == (num_graphs, num_classes)
    np.testing.assert_allclose(np.asarray(out), np.asarray(ref), rtol=2e-3, atol=2e-3)
    print("KERNEL_OK")
</pallas_src>

<mosaic_0001>
module attributes {stable_mosaic.version = 11 : i64} {
  func.func @proj_kernel(%arg0: memref<32x3xf32, #tpu.memory_space<vmem>>, %arg1: memref<3x32xf32, #tpu.memory_space<vmem>>, %arg2: memref<32x32xf32, #tpu.memory_space<vmem>>) attributes {dimension_semantics = [], scalar_prefetch = 0 : i64, scratch_operands = 0 : i64, tpu.core_type = #tpu.core_type<tc>} {
    %c0 = arith.constant 0 : index
    %c0_0 = arith.constant 0 : index
    %0 = vector.load %arg0[%c0, %c0_0] : memref<32x3xf32, #tpu.memory_space<vmem>>, vector<32x3xf32>
    %c0_1 = arith.constant 0 : index
    %c0_2 = arith.constant 0 : index
    %1 = vector.load %arg1[%c0_1, %c0_2] : memref<3x32xf32, #tpu.memory_space<vmem>>, vector<3x32xf32>
    %cst = arith.constant dense<0.000000e+00> : vector<32x32xf32>
    %2 = tpu.matmul %0, %1, %cst {dimension_numbers = #tpu.dot_dimension_numbers<[1], [0], [0], [1], [0, 0, 1, 1], [], []>} : vector<32x3xf32>, vector<3x32xf32>, vector<32x32xf32> -> vector<32x32xf32>
    %c0_3 = arith.constant 0 : index
    %c0_4 = arith.constant 0 : index
    %3 = vector.load %arg2[%c0_3, %c0_4] : memref<32x32xf32, #tpu.memory_space<vmem>>, vector<32x32xf32>
    tpu.vector_store %arg2[%c0_3, %c0_4], %2 {strides = array<i32>} : memref<32x32xf32, #tpu.memory_space<vmem>>, vector<32x32xf32>,
    return
  }
}

</mosaic_0001>

<llo_original>
// kernel: tpu_custom_call.1
$region0: #{tpu_custom_call.1}
  #allocation0 [shape = 'u32[]', space=smem, size = 0x4, offset = 0x4, fixed_abs, tag = 'smem constant byte address 0x4 - core index']
  #allocation1 [shape = 'u32[144,128]{1,0:T(1,128)}', space=vmem, size = 0x12000, scoped, tag = 'internal scratch']
  %s0 = inlined_call_operand.vmem [shape: f32[32,3], index: 0, kind: input, shape index: {}]
  %s1 = inlined_call_operand.vmem [shape: f32[3,32], index: 1, kind: input, shape index: {}]
  %s2 = inlined_call_operand.hbm [shape: f32[32,32], index: 2, kind: output, shape index: {}]
  %s3 = sld [smem:[#allocation0]]
  $region18: #{tpu_custom_call.1} parent=0
    _
  %s5 = ssub.s32 1, %s3
  %s6 = scalar_select 0, %s5, %s3
  $region1: #{tpu_custom_call.1} parent=0
    #allocation2 [shape = 'u8[16384]{0}', space=vmem, size = 0x4000, scoped, tag = 'output window, operand 0, single buffered']
    #allocation3 [shape = 's32[1]{0}', space=sflag, size = 0x4, scoped, tag = 'scoped memory for tpu_custom_call.1']
    %7 = vsyncpa [#allocation3], 0
    // Predicated region
    $region2: #{tpu_custom_call.1} parent=1 // pred_check
      _
    $region3: #{tpu_custom_call.1} parent=1 // pred_check_branch
      %9 = sbr.rel (0) target = $region5
    $region4: #{tpu_custom_call.1} parent=1 // pred_region
      _
    $region5: #{tpu_custom_call.1} parent=1 // pred_fallthru
      _
    // Predicated region
    $region6: #{tpu_custom_call.1} parent=1 // pred_check
      _
    $region7: #{tpu_custom_call.1} parent=1 // pred_check_branch
      %11 = sbr.rel (0) target = $region9
    $region8: #{tpu_custom_call.1} parent=1 // pred_region
      _
    $region9: #{tpu_custom_call.1} parent=1 // pred_fallthru
      _
    %v12 = vld [vmem:[%s0] sm:$0xff]
    %v13 = vld [vmem:[%s0 + $0x8] sm:$0xff]
    %v14 = vld [vmem:[%s0 + $0x10] sm:$0xff]
    %v15 = vld [vmem:[%s0 + $0x18] sm:$0xff]
    %v16 = vld [vmem:[%s1] sm:$0x7]
    %vm17 = vcmask 23552
    %v19 = vsel %vm17, %v12, 0
    %v22 = vsel %vm17, %v13, 0
    %v25 = vsel %vm17, %v14, 0
    %v28 = vsel %vm17, %v15, 0
    %vm30 = vcmask 1042432
    %v32 = vsel %vm30, %v16, 0
    %34 = vmatprep.subr.mxu0 0.0
    %35 = vmatpush1.msra.mxu0 0.0
    %36 = vmatprep.subr.mxu0 0.0
    %37 = vmatpush1.msra.mxu0 0.0
    %38 = vmatprep.subr.mxu0 0.0
    %39 = vmatpush1.msra.mxu0 0.0
    %40 = vmatprep.subr.mxu0 0.0
    %41 = vmatpush1.msra.mxu0 0.0
    %42 = vmatprep.subr.mxu0 0.0
    %43 = vmatpush1.msra.mxu0 0.0
    %44 = vmatprep.subr.mxu0 0.0
    %45 = vmatpush1.msra.mxu0 0.0
    %46 = vmatprep.subr.mxu0 0.0
    %47 = vmatpush1.msra.mxu0 0.0
    %48 = vmatprep.subr.mxu0 0.0
    %49 = vmatpush1.msra.mxu0 0.0
    %50 = vmatprep.subr.mxu0 0.0
    %51 = vmatpush1.msra.mxu0 0.0
    %52 = vmatprep.subr.mxu0 0.0
    %53 = vmatpush1.msra.mxu0 0.0
    %54 = vmatprep.subr.mxu0 0.0
    %55 = vmatpush1.msra.mxu0 0.0
    %56 = vmatprep.subr.mxu0 0.0
    %57 = vmatpush1.msra.mxu0 0.0
    %58 = vmatprep.subr.mxu0 0.0
    %59 = vmatpush1.msra.mxu0 0.0
    %60 = vmatprep.subr.mxu0 0.0
    %61 = vmatpush1.msra.mxu0 0.0
    %62 = vmatprep.subr.mxu0 0.0
    %63 = vmatpush1.msra.mxu0 0.0
    %64 = vmatprep.subr.mxu0 0.0
    %65 = vmatpush1.msra.mxu0 %v32
    %66 = vmatprep.subr.mxu0 0.0
    %67 = vmatpush2.msra.mxu0 0.0
    %68 = vmatprep.subr.mxu0 0.0
    %69 = vmatpush2.msra.mxu0 0.0
    %70 = vmatprep.subr.mxu0 0.0
    %71 = vmatpush2.msra.mxu0 0.0
    %72 = vmatprep.subr.mxu0 0.0
    %73 = vmatpush2.msra.mxu0 0.0
    %74 = vmatprep.subr.mxu0 0.0
    %75 = vmatpush2.msra.mxu0 0.0
    %76 = vmatprep.subr.mxu0 0.0
    %77 = vmatpush2.msra.mxu0 0.0
    %78 = vmatprep.subr.mxu0 0.0
    %79 = vmatpush2.msra.mxu0 0.0
    %80 = vmatprep.subr.mxu0 0.0
    %81 = vmatpush2.msra.mxu0 0.0
    %82 = vmatprep.subr.mxu0 0.0
    %83 = vmatpush2.msra.mxu0 0.0
    %84 = vmatprep.subr.mxu0 0.0
    %85 = vmatpush2.msra.mxu0 0.0
    %86 = vmatprep.subr.mxu0 0.0
    %87 = vmatpush2.msra.mxu0 0.0
    %88 = vmatprep.subr.mxu0 0.0
    %89 = vmatpush2.msra.mxu0 0.0
    %90 = vmatprep.subr.mxu0 0.0
    %91 = vmatpush2.msra.mxu0 0.0
    %92 = vmatprep.subr.mxu0 0.0
    %93 = vmatpush2.msra.mxu0 0.0
    %94 = vmatprep.subr.mxu0 0.0
    %95 = vmatpush2.msra.mxu0 0.0
    %96 = vmatprep.subr.mxu0 0.0
    %97 = vmatpush2.msra.mxu0 0.0
    %98 = vmatprep.mubr.f32.mxu0 0.0
    %99 = vmatmul.mubr.f32.gmra.mxu0 %v19
    %v100 = vpop.f32.mrf.mxu0
    %v101 = vadd.f32 0.0, %v100
    %v102 = vpop.f32.mrf.mxu0
    %103 = vmatprep.mubr.f32.mxu0 0.0
    %104 = vmatmul.mubr.f32.gmra.mxu0 %v22
    %v105 = vpop.f32.mrf.mxu0
    %v106 = vadd.f32 0.0, %v105
    %v107 = vpop.f32.mrf.mxu0
    %108 = vmatprep.mubr.f32.mxu0 0.0
    %109 = vmatmul.mubr.f32.gmra.mxu0 %v25
    %v110 = vpop.f32.mrf.mxu0
    %v111 = vadd.f32 0.0, %v110
    %v112 = vpop.f32.mrf.mxu0
    %113 = vmatprep.mubr.f32.mxu0 0.0
    %114 = vmatmul.mubr.f32.gmra.mxu0 %v28
    %v115 = vpop.f32.mrf.mxu0
    %v116 = vadd.f32 0.0, %v115
    %v117 = vpop.f32.mrf.mxu0
    %118 = vdwg.mxu0
    %vm119 = vcmask 261120
    %120 = vst.msk [vmem:[#allocation2] sm:$0xff] %vm119, %v101
    %121 = vst.msk [vmem:[#allocation2 + $0x8] sm:$0xff] %vm119, %v106
    %122 = vst.msk [vmem:[#allocation2 + $0x10] sm:$0xff] %vm119, %v111
    %123 = vst.msk [vmem:[#allocation2 + $0x18] sm:$0xff] %vm119, %v116
    // Predicated region
    $region10: #{tpu_custom_call.1} parent=1 // pred_check
      _
    $region11: #{tpu_custom_call.1} parent=1 // pred_check_branch
      %125 = sbr.rel (0) target = $region13
    $region12: #{tpu_custom_call.1} parent=1 // pred_region
      %s127 = ssub.s32 512, 512
      %128 = vsyncadd [#allocation3], %s127
      %s129 = sshll.u32 [#allocation2], 4
      %s130 = int_to_ptr.vmem [resolvable:$true] %s129
      %135 = dma.vmem_to_hbm [thread:$0]  %s130, 512, %s2, [#allocation3], 128, 128, 8
    $region13: #{tpu_custom_call.1} parent=1 // pred_fallthru
      _
    // Predicated region
    $region14: #{tpu_custom_call.1} parent=1 // pred_check
      _
    $region15: #{tpu_custom_call.1} parent=1 // pred_check_branch
      %137 = sbr.rel (0) target = $region17
    $region16: #{tpu_custom_call.1} parent=1 // pred_region
      %138 = dma.done [#allocation3], 512
    $region17: #{tpu_custom_call.1} parent=1 // pred_fallthru
      _
    %139 = vsyncpa [#allocation3], 1

</llo_original>
